<compile_context>
chip_gen: v7x
topology: tpu7x:2x2x1
jax: 0.10.0
libtpu: 0.0.40
codegen_flags: <defaults>
</compile_context>

<pallas_src>
import functools

import jax
import jax.numpy as jnp
import numpy as np
from jax.experimental import pallas as pl
from jax.experimental.pallas import tpu as pltpu


# ----------------------------------------------------------------------------
# Hardware-aware configuration (v5e / v6e / v7x).
# ----------------------------------------------------------------------------
def _round_up(x, m):
    return ((x + m - 1) // m) * m


def _tpu_generation():
    try:
        kind = jax.devices()[0].device_kind.lower()
    except Exception:
        return "unknown"
    if "v5 lite" in kind or "v5lite" in kind or "v5e" in kind:
        return "v5e"
    if "v6" in kind:
        return "v6e"
    if "v7" in kind or "tpu7" in kind or "7x" in kind:
        return "v7x"
    return "unknown"


def _vmem_limit_bytes(gen):
    """Scoped-VMEM limit: generous on the 128 MiB parts (v5e/v6e), compiler
    headroom on v7x whose physical per-TC VMEM is only 64 MiB."""
    phys = None
    try:
        phys = int(pltpu.get_tpu_info().vmem_capacity_bytes)
    except Exception:
        phys = None
    if not phys or phys <= 0:
        phys = {"v5e": 128, "v6e": 128, "v7x": 64}.get(gen, 64) * 1024 * 1024
    return min(int(phys * 0.82), 110 * 1024 * 1024)


def _row_tile_target(gen):
    # Weight-stream arithmetic intensity of the layer kernel is exactly `tm`
    # FLOPs/byte, so tm must exceed peak_flops/HBM_BW to be MXU-bound:
    #   v5e ~240, v7x ~310, v6e ~670.
    return {"v5e": 256, "v6e": 768, "v7x": 512}.get(gen, 256)


def _choose_col_tile(d):
    for t in (512, 256, 128):
        if d % t == 0:
            return t
    raise ValueError("hidden dim must be a multiple of 128 (TPU lanes)")


def _choose_row_tile(m_rows, d, tn, *, gen, vmem_budget, full_width_out):
    """Largest bf16-packed (multiple-of-16) row tile <= the per-generation
    target that keeps the double-buffered working set inside the VMEM budget."""
    tm = min(_row_tile_target(gen), _round_up(m_rows, 16))
    tm = max(16, _round_up(tm, 16))

    def working_set(t):
        out_cols = d if full_width_out else tn
        return (2 * t * d * 4              # x block, f32, double-buffered
                + 2 * d * tn * 2           # folded W slab, bf16, double-buffered
                + 2 * t * out_cols * 4     # output block, double-buffered
                + t * d * 2                # bf16 normalized-row scratch
                + 4 * tn * 4 + 4 * d * 4)  # bias / gamma / beta slabs

    while tm > 16 and working_set(tm) > vmem_budget:
        tm = max(16, _round_up(tm // 2, 16))

    # Only v7x has two TensorCores per chip: keep >= 2 row steps there so the
    # "parallel" row axis can shard across them.  On v5e/v6e (single TC) a
    # halving would only shrink the tile and double W re-streams.
    if gen == "v7x" and m_rows >= 32 and m_rows <= tm:
        tm = max(16, _round_up(_round_up(m_rows, 16) // 2, 16))
    return tm


# ----------------------------------------------------------------------------
# Kernels.
# ----------------------------------------------------------------------------
def _layer_kernel(x_ref, w_ref, b_ref, o_ref, normed_ref, *, hidden, eps,
                  col_tile):
    """out = x + LayerNorm_layer(x) @ W' + b'  (LN affine folded into W'/b')."""
    j = pl.program_id(1)

    # LayerNorm statistics once per row block (j == 0); bf16 normalized rows
    # cached in VMEM scratch and reused for every output-column slab of W.
    @pl.when(j == 0)
    def _():
        x = x_ref[...].astype(jnp.float32)
        mean = jnp.mean(x, axis=-1, keepdims=True)
        diff = x - mean
        # torch.std(-1) is UNBIASED (divide by D-1); eps is added to std.
        var = jnp.sum(diff * diff, axis=-1, keepdims=True) / (hidden - 1)
        inv = pl.reciprocal(jnp.sqrt(var) + eps, approx=False)
        normed_ref[...] = (diff * inv).astype(jnp.bfloat16)

    # bf16 x bf16 MXU matmul, f32 accumulation.
    y = jnp.dot(normed_ref[...], w_ref[...],
                preferred_element_type=jnp.float32)
    y = y + b_ref[...]

    # Residual add against this output-column slab of x (dropout eval = id).
    col = pl.multiple_of(j * col_tile, 128)
    x_cols = x_ref[:, pl.ds(col, col_tile)].astype(jnp.float32)
    o_ref[...] = (x_cols + y).astype(o_ref.dtype)


def _layer_final_kernel(x_ref, w_ref, b_ref, g_ref, bt_ref, o_ref, normed_ref,
                        *, hidden, eps, col_tile):
    """Last encoder layer + final Encoder-level LayerNorm fused in one pass.

    The (tm, D) output block stays resident in VMEM across the j (N-slab)
    axis; the final LN is applied in-place at the last j step, just before the
    block is written back to HBM."""
    j = pl.program_id(1)

    @pl.when(j == 0)
    def _():
        x = x_ref[...].astype(jnp.float32)
        mean = jnp.mean(x, axis=-1, keepdims=True)
        diff = x - mean
        var = jnp.sum(diff * diff, axis=-1, keepdims=True) / (hidden - 1)
        inv = pl.reciprocal(jnp.sqrt(var) + eps, approx=False)
        normed_ref[...] = (diff * inv).astype(jnp.bfloat16)

    y = jnp.dot(normed_ref[...], w_ref[...],
                preferred_element_type=jnp.float32)
    y = y + b_ref[...]
    col = pl.multiple_of(j * col_tile, 128)
    x_cols = x_ref[:, pl.ds(col, col_tile)].astype(jnp.float32)
    o_ref[:, pl.ds(col, col_tile)] = (x_cols + y).astype(o_ref.dtype)

    @pl.when(j == pl.num_programs(1) - 1)
    def _():
        z = o_ref[...].astype(jnp.float32)
        mean = jnp.mean(z, axis=-1, keepdims=True)
        diff = z - mean
        var = jnp.sum(diff * diff, axis=-1, keepdims=True) / (hidden - 1)
        inv = pl.reciprocal(jnp.sqrt(var) + eps, approx=False)
        o_ref[...] = (g_ref[...] * diff * inv + bt_ref[...]).astype(o_ref.dtype)


def _layernorm_kernel(x_ref, gamma_ref, beta_ref, o_ref, *, hidden, eps):
    x = x_ref[...].astype(jnp.float32)
    mean = jnp.mean(x, axis=-1, keepdims=True)
    diff = x - mean
    var = jnp.sum(diff * diff, axis=-1, keepdims=True) / (hidden - 1)
    inv = pl.reciprocal(jnp.sqrt(var) + eps, approx=False)
    o_ref[...] = (gamma_ref[...] * diff * inv + beta_ref[...]).astype(o_ref.dtype)


# ----------------------------------------------------------------------------
# Wrappers.
# ----------------------------------------------------------------------------
def _layer_cost(m_pad, d, tm):
    n_row_blocks = m_pad // tm
    return pl.CostEstimate(
        flops=2 * m_pad * d * d + 10 * m_pad * d,
        transcendentals=2 * m_pad,
        bytes_accessed=(m_pad * d * 4                 # x read
                        + n_row_blocks * d * d * 2    # W re-streamed / row block
                        + m_pad * d * 4               # output write
                        + d * 4))                     # folded bias


def _fused_layer(x2, w_bf16, b_fold, *, eps, tm, tn, vmem_limit):
    m_pad, d = x2.shape
    kernel = functools.partial(_layer_kernel, hidden=d, eps=eps, col_tile=tn)
    return pl.pallas_call(
        kernel,
        out_shape=jax.ShapeDtypeStruct((m_pad, d), x2.dtype),
        grid_spec=pltpu.PrefetchScalarGridSpec(
            num_scalar_prefetch=0,
            grid=(m_pad // tm, d // tn),
            in_specs=[
                pl.BlockSpec((tm, d), lambda i, j: (i, 0)),   # x row block
                pl.BlockSpec((d, tn), lambda i, j: (0, j)),   # folded W slab
                pl.BlockSpec((1, tn), lambda i, j: (0, j)),   # folded bias slab
            ],
            out_specs=pl.BlockSpec((tm, tn), lambda i, j: (i, j)),
            scratch_shapes=[pltpu.VMEM((tm, d), jnp.bfloat16)],
        ),
        compiler_params=pltpu.CompilerParams(
            dimension_semantics=("parallel", "arbitrary"),
            vmem_limit_bytes=vmem_limit),
        cost_estimate=_layer_cost(m_pad, d, tm),
    )(x2, w_bf16, b_fold)


def _fused_layer_final(x2, w_bf16, b_fold, gamma, beta, *, eps, tm, tn,
                       vmem_limit):
    m_pad, d = x2.shape
    kernel = functools.partial(_layer_final_kernel, hidden=d, eps=eps,
                               col_tile=tn)
    return pl.pallas_call(
        kernel,
        out_shape=jax.ShapeDtypeStruct((m_pad, d), x2.dtype),
        grid_spec=pltpu.PrefetchScalarGridSpec(
            num_scalar_prefetch=0,
            grid=(m_pad // tm, d // tn),
            in_specs=[
                pl.BlockSpec((tm, d), lambda i, j: (i, 0)),   # x row block
                pl.BlockSpec((d, tn), lambda i, j: (0, j)),   # folded W slab
                pl.BlockSpec((1, tn), lambda i, j: (0, j)),   # folded bias slab
                pl.BlockSpec((1, d), lambda i, j: (0, 0)),    # final LN gamma
                pl.BlockSpec((1, d), lambda i, j: (0, 0)),    # final LN beta
            ],
            out_specs=pl.BlockSpec((tm, d), lambda i, j: (i, 0)),  # resident
            scratch_shapes=[pltpu.VMEM((tm, d), jnp.bfloat16)],
        ),
        compiler_params=pltpu.CompilerParams(
            dimension_semantics=("parallel", "arbitrary"),
            vmem_limit_bytes=vmem_limit),
        cost_estimate=_layer_cost(m_pad, d, tm),
    )(x2, w_bf16, b_fold,
      gamma.reshape(1, d).astype(jnp.float32),
      beta.reshape(1, d).astype(jnp.float32))


def _layernorm(x2, gamma, beta, *, eps, vmem_limit):
    """Standalone final LayerNorm (only used for the zero-layer path)."""
    m, d = x2.shape
    tm = max(16, min(512, _round_up(m, 16)))
    while tm > 16 and (4 * tm * d * 4 + 4 * d * 4) > vmem_limit:
        tm = max(16, _round_up(tm // 2, 16))
    m_pad = pl.cdiv(m, tm) * tm
    xp = jnp.pad(x2, ((0, m_pad - m), (0, 0))) if m_pad != m else x2

    kernel = functools.partial(_layernorm_kernel, hidden=d, eps=eps)
    out = pl.pallas_call(
        kernel,
        out_shape=jax.ShapeDtypeStruct((m_pad, d), x2.dtype),
        grid_spec=pltpu.PrefetchScalarGridSpec(
            num_scalar_prefetch=0,
            grid=(m_pad // tm,),
            in_specs=[
                pl.BlockSpec((tm, d), lambda i: (i, 0)),
                pl.BlockSpec((1, d), lambda i: (0, 0)),
                pl.BlockSpec((1, d), lambda i: (0, 0)),
            ],
            out_specs=pl.BlockSpec((tm, d), lambda i: (i, 0)),
        ),
        compiler_params=pltpu.CompilerParams(
            dimension_semantics=("parallel",),
            vmem_limit_bytes=vmem_limit),
    )(xp, gamma.reshape(1, d).astype(jnp.float32),
      beta.reshape(1, d).astype(jnp.float32))
    return out[:m] if m_pad != m else out


# ----------------------------------------------------------------------------
# One-time parameter preprocessing + forward.
# ----------------------------------------------------------------------------
def fold_layer_params(layer_params):
    """Fold each layer's LayerNorm affine into the Linear weights (one-time):
    W' = diag(gamma) @ W  (bf16),   b' = beta @ W + bias  (f32)."""
    folded = []
    for gamma, beta, w, bias in layer_params:
        w_f32 = jnp.asarray(w, dtype=jnp.float32)
        w_fold = (jnp.asarray(gamma, jnp.float32)[:, None] * w_f32
                  ).astype(jnp.bfloat16)
        b_fold = (jnp.asarray(beta, jnp.float32) @ w_f32
                  + jnp.asarray(bias, jnp.float32)).reshape(1, -1)
        folded.append((w_fold, b_fold))
    return folded


def encoder_forward(x, mask, folded_layers, norm_gamma, norm_beta, *, eps=1e-6):
    """Encoder.forward: apply each cloned layer, then the final LayerNorm.

    x: [B, S, D]; folded_layers: output of fold_layer_params.
    `mask` accepted for API parity but unused here.
    # TODO(synk): the real EncoderLayer internals (self-attention over `mask`,
    #             feed-forward) are not in the provided spec; a deterministic
    #             residual Linear sublayer stands in.  Dropout not modelled
    #             (eval semantics: identity).
    """
    del mask
    b, s, d = x.shape
    assert d % 128 == 0, "hidden dim must be a multiple of 128 (TPU lanes)"
    assert d > 1
    m = b * s
    x2 = x.reshape(m, d)

    gen = _tpu_generation()
    vmem_limit = _vmem_limit_bytes(gen)

    if not folded_layers:
        out2 = _layernorm(x2, norm_gamma, norm_beta, eps=eps,
                          vmem_limit=vmem_limit)
        return out2.reshape(b, s, d)

    tn = _choose_col_tile(d)
    # One row tile for every layer call; the last layer keeps a full-width
    # output block resident, so size against that (tighter) VMEM budget.
    tm = _choose_row_tile(m, d, tn, gen=gen, vmem_budget=vmem_limit,
                          full_width_out=True)

    # Pad ONCE before the layer loop, slice ONCE at the end.
    m_pad = pl.cdiv(m, tm) * tm
    if m_pad != m:
        x2 = jnp.pad(x2, ((0, m_pad - m), (0, 0)))

    n_layers = len(folded_layers)
    for li, (w_bf16, b_fold) in enumerate(folded_layers):
        if li == n_layers - 1:
            # Final Encoder LayerNorm fused into the last layer's kernel.
            x2 = _fused_layer_final(x2, w_bf16, b_fold, norm_gamma, norm_beta,
                                    eps=eps, tm=tm, tn=tn,
                                    vmem_limit=vmem_limit)
        else:
            x2 = _fused_layer(x2, w_bf16, b_fold, eps=eps, tm=tm, tn=tn,
                              vmem_limit=vmem_limit)

    out2 = x2[:m] if m_pad != m else x2
    return out2.reshape(b, s, d)


# ----------------------------------------------------------------------------
# Pure-JAX reference (f32 everywhere) for correctness checking.
# ----------------------------------------------------------------------------
def _reference(x, layer_params, norm_gamma, norm_beta, eps=1e-6):
    def ln(z, g, bta):
        mean = jnp.mean(z, axis=-1, keepdims=True)
        diff = z - mean
        var = jnp.sum(diff * diff, axis=-1, keepdims=True) / (z.shape[-1] - 1)
        std = jnp.sqrt(var)
        return g * diff / (std + eps) + bta

    xf = x.astype(jnp.float32)
    for (g, bta, w, bias) in layer_params:
        xf = xf + ln(xf, g, bta) @ w.astype(jnp.float32) + bias
    return ln(xf, norm_gamma, norm_beta)


if __name__ == "__main__":
    def build(B, S, D, N, key):
        keys = jax.random.split(key, 4 * N + 3)
        x = jax.random.normal(keys[0], (B, S, D), dtype=jnp.float32)
        layer_params = []
        for n in range(N):
            gamma = 1.0 + 0.1 * jax.random.normal(keys[4 * n + 1], (D,),
                                                  dtype=jnp.float32)
            beta = 0.05 * jax.random.normal(keys[4 * n + 2], (D,),
                                            dtype=jnp.float32)
            w = jax.random.normal(keys[4 * n + 3], (D, D),
                                  dtype=jnp.float32) * 0.05
            bias = jax.random.normal(keys[4 * n + 4], (D,),
                                     dtype=jnp.float32) * 0.01
            layer_params.append((gamma, beta, w, bias))
        norm_gamma = 1.0 + 0.1 * jax.random.normal(keys[-2], (D,),
                                                   dtype=jnp.float32)
        norm_beta = 0.05 * jax.random.normal(keys[-1], (D,), dtype=jnp.float32)
        return x, layer_params, norm_gamma, norm_beta

    k1, k2 = jax.random.split(jax.random.PRNGKey(0))

    # Main case: B=2, S=8, D=128, 2 cloned encoder layers.
    x, layer_params, g, bta = build(2, 8, 128, 2, k1)
    folded = fold_layer_params(layer_params)          # one-time preprocessing
    out = jax.block_until_ready(encoder_forward(x, None, folded, g, bta))
    ref = _reference(x, layer_params, g, bta)
    np.testing.assert_allclose(np.asarray(out), np.asarray(ref),
                               rtol=1.5e-2, atol=1.5e-2)

    # Row-padding path: M = 10 is not a multiple of the 16-row tile.
    xp, lpp, gp, bp = build(2, 5, 128, 2, k2)
    foldedp = fold_layer_params(lpp)
    outp = jax.block_until_ready(encoder_forward(xp, None, foldedp, gp, bp))
    refp = _reference(xp, lpp, gp, bp)
    np.testing.assert_allclose(np.asarray(outp), np.asarray(refp),
                               rtol=1.5e-2, atol=1.5e-2)

    print("KERNEL_OK")
</pallas_src>

<mosaic_0001>
module attributes {stable_mosaic.version = 11 : i64} {
  func.func @_layer_kernel(%arg0: i32, %arg1: i32, %arg2: memref<16x128xf32, #tpu.memory_space<vmem>>, %arg3: memref<128x128xbf16, #tpu.memory_space<vmem>>, %arg4: memref<1x128xf32, #tpu.memory_space<vmem>>, %arg5: memref<16x128xf32, #tpu.memory_space<vmem>>, %arg6: memref<16x128xbf16, #tpu.memory_space<vmem>>) attributes {dimension_semantics = [#tpu.dimension_semantics<parallel>, #tpu.dimension_semantics<arbitrary>], iteration_bounds = array<i64: 1, 1>, scalar_prefetch = 0 : i64, scratch_operands = 1 : i64, tpu.core_type = #tpu.core_type<tc>, window_params = [{transform_indices = @transform_0, window_bounds = array<i64: 16, 128>}, {transform_indices = @transform_1, window_bounds = array<i64: 128, 128>}, {transform_indices = @transform_2, window_bounds = array<i64: 1, 128>}, {transform_indices = @transform_3, window_bounds = array<i64: 16, 128>}]} {
    %c0_i32 = arith.constant 0 : i32
    %0 = arith.cmpi eq, %arg1, %c0_i32 : i32
    %1 = arith.extui %0 : i1 to i32
    %c0_i32_0 = arith.constant 0 : i32
    %2 = arith.cmpi ne, %1, %c0_i32_0 : i32
    scf.if %2 {
      %c0_9 = arith.constant 0 : index
      %c0_10 = arith.constant 0 : index
      %15 = vector.load %arg2[%c0_9, %c0_10] : memref<16x128xf32, #tpu.memory_space<vmem>>, vector<16x128xf32>
      %cst_11 = arith.constant dense<0.000000e+00> : vector<16xf32>
      %16 = vector.multi_reduction <add>, %15, %cst_11 [1] : vector<16x128xf32> to vector<16xf32>
      %17 = vector.shape_cast %16 : vector<16xf32> to vector<16x1xf32>
      %cst_12 = arith.constant 1.280000e+02 : f32
      %18 = vector.broadcast %cst_12 : f32 to vector<16x1xf32>
      %19 = arith.divf %17, %18 : vector<16x1xf32>
      %20 = vector.broadcast %19 : vector<16x1xf32> to vector<16x128xf32>
      %21 = arith.subf %15, %20 : vector<16x128xf32>
      %22 = arith.mulf %21, %21 : vector<16x128xf32>
      %cst_13 = arith.constant dense<0.000000e+00> : vector<16xf32>
      %23 = vector.multi_reduction <add>, %22, %cst_13 [1] : vector<16x128xf32> to vector<16xf32>
      %24 = vector.shape_cast %23 : vector<16xf32> to vector<16x1xf32>
      %cst_14 = arith.constant 1.270000e+02 : f32
      %25 = vector.broadcast %cst_14 : f32 to vector<16x1xf32>
      %26 = arith.divf %24, %25 : vector<16x1xf32>
      %27 = math.sqrt %26 : vector<16x1xf32>
      %cst_15 = arith.constant 9.99999997E-7 : f32
      %28 = vector.broadcast %cst_15 : f32 to vector<16x1xf32>
      %29 = arith.addf %27, %28 : vector<16x1xf32>
      %30 = tpu.reciprocal %29 : vector<16x1xf32> -> vector<16x1xf32>
      %31 = vector.broadcast %30 : vector<16x1xf32> to vector<16x128xf32>
      %32 = arith.mulf %21, %31 : vector<16x128xf32>
      %33 = arith.truncf %32 : vector<16x128xf32> to vector<16x128xbf16>
      %c0_16 = arith.constant 0 : index
      %c0_17 = arith.constant 0 : index
      %34 = vector.load %arg6[%c0_16, %c0_17] : memref<16x128xbf16, #tpu.memory_space<vmem>>, vector<16x128xbf16>
      tpu.vector_store %arg6[%c0_16, %c0_17], %33 {strides = array<i32>} : memref<16x128xbf16, #tpu.memory_space<vmem>>, vector<16x128xbf16>,
    } else {
    }
    %c0 = arith.constant 0 : index
    %c0_1 = arith.constant 0 : index
    %3 = vector.load %arg6[%c0, %c0_1] : memref<16x128xbf16, #tpu.memory_space<vmem>>, vector<16x128xbf16>
    %c0_2 = arith.constant 0 : index
    %c0_3 = arith.constant 0 : index
    %4 = vector.load %arg3[%c0_2, %c0_3] : memref<128x128xbf16, #tpu.memory_space<vmem>>, vector<128x128xbf16>
    %cst = arith.constant dense<0.000000e+00> : vector<16x128xf32>
    %5 = tpu.matmul %3, %4, %cst {dimension_numbers = #tpu.dot_dimension_numbers<[1], [0], [0], [1], [0, 0, 1, 1], [], []>} : vector<16x128xbf16>, vector<128x128xbf16>, vector<16x128xf32> -> vector<16x128xf32>
    %c0_4 = arith.constant 0 : index
    %c0_5 = arith.constant 0 : index
    %6 = vector.load %arg4[%c0_4, %c0_5] : memref<1x128xf32, #tpu.memory_space<vmem>>, vector<1x128xf32>
    %7 = vector.broadcast %6 : vector<1x128xf32> to vector<16x128xf32>
    %8 = arith.addf %5, %7 : vector<16x128xf32>
    %c128_i32 = arith.constant 128 : i32
    %9 = arith.muli %arg1, %c128_i32 : i32
    %10 = tpu.assume_multiple %9, 128 : i32
    %c0_6 = arith.constant 0 : index
    %11 = arith.index_cast %10 : i32 to index
    %12 = vector.load %arg2[%c0_6, %11] : memref<16x128xf32, #tpu.memory_space<vmem>>, vector<16x128xf32>
    %13 = arith.addf %12, %8 : vector<16x128xf32>
    %c0_7 = arith.constant 0 : index
    %c0_8 = arith.constant 0 : index
    %14 = vector.load %arg5[%c0_7, %c0_8] : memref<16x128xf32, #tpu.memory_space<vmem>>, vector<16x128xf32>
    tpu.vector_store %arg5[%c0_7, %c0_8], %13 {strides = array<i32>} : memref<16x128xf32, #tpu.memory_space<vmem>>, vector<16x128xf32>,
    return
  }
  func.func @transform_0(%arg0: i32, %arg1: i32) -> (i32, i32) {
    %c0_i32 = arith.constant 0 : i32
    %c0_i32_0 = arith.constant 0 : i32
    return %arg0, %c0_i32 : i32, i32
  }
  func.func @transform_1(%arg0: i32, %arg1: i32) -> (i32, i32) {
    %c0_i32 = arith.constant 0 : i32
    %c0_i32_0 = arith.constant 0 : i32
    return %c0_i32, %arg1 : i32, i32
  }
  func.func @transform_2(%arg0: i32, %arg1: i32) -> (i32, i32) {
    %c0_i32 = arith.constant 0 : i32
    %c0_i32_0 = arith.constant 0 : i32
    return %c0_i32, %arg1 : i32, i32
  }
  func.func @transform_3(%arg0: i32, %arg1: i32) -> (i32, i32) {
    %c0_i32 = arith.constant 0 : i32
    return %arg0, %arg1 : i32, i32
  }
}

</mosaic_0001>

<llo_original>
// kernel: tpu_custom_call.1
$region0: #{tpu_custom_call.1}
  #allocation0 [shape = 'u32[]', space=smem, size = 0x4, offset = 0x4, fixed_abs, tag = 'smem constant byte address 0x4 - core index']
  #allocation1 [shape = 'u32[144,128]{1,0:T(1,128)}', space=vmem, size = 0x12000, scoped, tag = 'internal scratch']
  #allocation2 [shape = 'bf16[16,128]{1,0:T(16,128)(2,1)}', space=vmem, size = 0x1000, scoped, tag = 'scratch operand']
  %s0 = inlined_call_operand.hbm [shape: f32[16,128], index: 0, kind: input, shape index: {}]
  %s1 = inlined_call_operand.hbm [shape: bf16[128,128], index: 1, kind: input, shape index: {}]
  %s2 = inlined_call_operand.vmem [shape: f32[1,128], index: 2, kind: input, shape index: {}]
  %s3 = inlined_call_operand.hbm [shape: f32[16,128], index: 3, kind: output, shape index: {}]
  %s4 = sld [smem:[#allocation0]]
  $region34: #{tpu_custom_call.1} parent=0
    _
  %s6 = ssub.s32 1, %s4
  %s7 = scalar_select 0, %s6, %s4
  $region1: #{tpu_custom_call.1} parent=0
    #allocation3 [shape = 'u8[8192]{0}', space=vmem, size = 0x2000, scoped, tag = 'input window, operand 0, single buffered']
    #allocation4 [shape = 's32[1]{0}', space=sflag, size = 0x4, scoped, tag = 'scoped memory for tpu_custom_call.1']
    #allocation5 [shape = 's32[1]{0}', space=sflag, size = 0x4, scoped, tag = 'scoped memory for tpu_custom_call.1']
    #allocation6 [shape = 'u8[32768]{0}', space=vmem, size = 0x8000, scoped, tag = 'input window, operand 1, single buffered']
    #allocation7 [shape = 's32[1]{0}', space=sflag, size = 0x4, scoped, tag = 'scoped memory for tpu_custom_call.1']
    #allocation8 [shape = 'u8[8192]{0}', space=vmem, size = 0x2000, scoped, tag = 'output window, operand 0, single buffered']
    %8 = vsyncpa [#allocation4], 0
    %9 = vsyncpa [#allocation7], 0
    %10 = vsyncpa [#allocation5], 0
    // Predicated region
    $region2: #{tpu_custom_call.1} parent=1 // pred_check
      _
    $region3: #{tpu_custom_call.1} parent=1 // pred_check_branch
      %12 = sbr.rel (0) target = $region5
    $region4: #{tpu_custom_call.1} parent=1 // pred_region
      %s14 = ssub.s32 256, 256
      %15 = vsyncadd [#allocation4], %s14
      %s16 = sshll.u32 [#allocation3], 4
      %s17 = int_to_ptr.vmem [resolvable:$true] %s16
      %22 = dma.hbm_to_vmem [thread:$0]  %s0, 256, %s17, [#allocation4], 128, 128, 8
    $region5: #{tpu_custom_call.1} parent=1 // pred_fallthru
      _
    // Predicated region
    $region6: #{tpu_custom_call.1} parent=1 // pred_check
      _
    $region7: #{tpu_custom_call.1} parent=1 // pred_check_branch
      %24 = sbr.rel (0) target = $region9
    $region8: #{tpu_custom_call.1} parent=1 // pred_region
      %s26 = ssub.s32 1024, 1024
      %27 = vsyncadd [#allocation7], %s26
      %s28 = sshll.u32 [#allocation6], 4
      %s29 = int_to_ptr.vmem [resolvable:$true] %s28
      %34 = dma.hbm_to_vmem [thread:$0]  %s1, 1024, %s29, [#allocation7], 64, 64, 4
    $region9: #{tpu_custom_call.1} parent=1 // pred_fallthru
      _
    // Predicated region
    $region10: #{tpu_custom_call.1} parent=1 // pred_check
      _
    $region11: #{tpu_custom_call.1} parent=1 // pred_check_branch
      %36 = sbr.rel (0) target = $region13
    $region12: #{tpu_custom_call.1} parent=1 // pred_region
      _
    $region13: #{tpu_custom_call.1} parent=1 // pred_fallthru
      _
    // Predicated region
    $region14: #{tpu_custom_call.1} parent=1 // pred_check
      _
    $region15: #{tpu_custom_call.1} parent=1 // pred_check_branch
      %38 = sbr.rel (0) target = $region17
    $region16: #{tpu_custom_call.1} parent=1 // pred_region
      %39 = dma.done [#allocation4], 256
    $region17: #{tpu_custom_call.1} parent=1 // pred_fallthru
      _
    // Predicated region
    $region18: #{tpu_custom_call.1} parent=1 // pred_check
      _
    $region19: #{tpu_custom_call.1} parent=1 // pred_check_branch
      %41 = sbr.rel (0) target = $region21
    $region20: #{tpu_custom_call.1} parent=1 // pred_region
      %42 = dma.done [#allocation7], 1024
    $region21: #{tpu_custom_call.1} parent=1 // pred_fallthru
      _
    %p44 = scmp.eq.s32.totalorder 0, 0
    // Predicated region
    $region22: #{tpu_custom_call.1} parent=1 // pred_check
      %p45 = pneg %p44
    $region23: #{tpu_custom_call.1} parent=1 // pred_check_branch
      %47 = sbr.rel (%p45) target = $region25
    $region24: #{tpu_custom_call.1} parent=1 // pred_region
      %v48 = vld [vmem:[#allocation3] sm:$0xff]
      %v49 = vld [vmem:[#allocation3 + $0x8] sm:$0xff]
      %50 = vadd.xlane.f32.xlu0 %v48
      %v51 = vpop.xlane.xlu0 %50
      %52 = vadd.xlane.f32.xlu0 %v49
      %v53 = vpop.xlane.xlu0 %52
      %v54 = vrcp.pop 128.0
      %v55 = vmul.f32 %v51, %v54
      %v56 = vmul.f32 %v53, %v54
      %v57 = vsub.f32 %v48, %v55
      %v58 = vsub.f32 %v49, %v56
      %v59 = vmul.f32 %v57, %v57
      %v60 = vmul.f32 %v58, %v58
      %61 = vadd.xlane.f32.xlu0 %v59
      %v62 = vpop.xlane.xlu0 %61
      %63 = vadd.xlane.f32.xlu0 %v60
      %v64 = vpop.xlane.xlu0 %63
      %v65 = vrcp.pop 127.0
      %v66 = vmul.f32 %v62, %v65
      %v67 = vmul.f32 %v64, %v65
      %v68 = vrsqrt.pop %v66
      %v69 = vmul.f32 %v66, %v68
      %vm70 = vcmp.eq.f32.partialorder %v66, inf
      %v71 = vsel %vm70, %v66, %v69
      %vm72 = vcmp.eq.f32.partialorder %v66, 0.0
      %v73 = vand.u32 %v66, 2147483648
      %v74 = vsel %vm72, %v73, %v71
      %v75 = vrsqrt.pop %v67
      %v76 = vmul.f32 %v67, %v75
      %vm77 = vcmp.eq.f32.partialorder %v67, inf
      %v78 = vsel %vm77, %v67, %v76
      %vm79 = vcmp.eq.f32.partialorder %v67, 0.0
      %v80 = vand.u32 %v67, 2147483648
      %v81 = vsel %vm79, %v80, %v78
      %v82 = vadd.f32 %v74, 1e-06
      %v83 = vadd.f32 %v81, 1e-06
      %v84 = vrcp.pop %v82
      %v85 = vrcp.pop %v83
      %v86 = vmul.f32 %v57, %v84
      %v87 = vmul.f32 %v58, %v85
      %v88 = vpack.c.bf16 %v87, %v86
      %89 = vst [vmem:[#allocation2] sm:$0xff] %v88
    $region25: #{tpu_custom_call.1} parent=1 // pred_fallthru
      _
    %v90 = vld [vmem:[#allocation2] sm:$0xff]
    %v91 = vld [vmem:[#allocation6] sm:$0xf]
    %v92 = vld [vmem:[#allocation6 + $0x4] sm:$0xf]
    %v93 = vld [vmem:[#allocation6 + $0x8] sm:$0xf]
    %v94 = vld [vmem:[#allocation6 + $0xc] sm:$0xf]
    %v95 = vld [vmem:[#allocation6 + $0x10] sm:$0xf]
    %v96 = vld [vmem:[#allocation6 + $0x14] sm:$0xf]
    %v97 = vld [vmem:[#allocation6 + $0x18] sm:$0xf]
    %v98 = vld [vmem:[#allocation6 + $0x1c] sm:$0xf]
    %v99 = vld [vmem:[#allocation6 + $0x20] sm:$0xf]
    %v100 = vld [vmem:[#allocation6 + $0x24] sm:$0xf]
    %v101 = vld [vmem:[#allocation6 + $0x28] sm:$0xf]
    %v102 = vld [vmem:[#allocation6 + $0x2c] sm:$0xf]
    %v103 = vld [vmem:[#allocation6 + $0x30] sm:$0xf]
    %v104 = vld [vmem:[#allocation6 + $0x34] sm:$0xf]
    %v105 = vld [vmem:[#allocation6 + $0x38] sm:$0xf]
    %v106 = vld [vmem:[#allocation6 + $0x3c] sm:$0xf]
    %v107 = vld [vmem:[%s2] sm:$0x1]
    %v109 = vlaneseq
    %v110 = vshrl.u32 %v109, 7
    %v111 = vsub.s32 0, %v110
    %v112 = vrot.slane %v107, %v111
    %v130 = vunpack.c.l.b16 %v91
    %v131 = vunpack.c.l.b16 %v92
    %v132 = vunpack.c.l.b16 %v93
    %v133 = vunpack.c.l.b16 %v94
    %v134 = vunpack.c.l.b16 %v95
    %v135 = vunpack.c.l.b16 %v96
    %v136 = vunpack.c.l.b16 %v97
    %v137 = vunpack.c.l.b16 %v98
    %v138 = vunpack.c.l.b16 %v99
    %v139 = vunpack.c.l.b16 %v100
    %v140 = vunpack.c.l.b16 %v101
    %v141 = vunpack.c.l.b16 %v102
    %v142 = vunpack.c.l.b16 %v103
    %v143 = vunpack.c.l.b16 %v104
    %v144 = vunpack.c.l.b16 %v105
    %v145 = vunpack.c.l.b16 %v106
    %v146 = vpack.c.b16 %v131, %v130
    %v147 = vpack.c.b16 %v133, %v132
    %v148 = vpack.c.b16 %v135, %v134
    %v149 = vpack.c.b16 %v137, %v136
    %v150 = vpack.c.b16 %v139, %v138
    %v151 = vpack.c.b16 %v141, %v140
    %v152 = vpack.c.b16 %v143, %v142
    %v153 = vpack.c.b16 %v145, %v144
    %162 = vmatprep.subr.bf16.mxu0 0
    %163 = vmatpush1.bf16.msra.mxu0 %v146
    %164 = vmatprep.subr.bf16.mxu0 0
    %165 = vmatpush1.bf16.msra.mxu0 %v147
    %166 = vmatprep.subr.bf16.mxu0 0
    %167 = vmatpush1.bf16.msra.mxu0 %v148
    %168 = vmatprep.subr.bf16.mxu0 0
    %169 = vmatpush1.bf16.msra.mxu0 %v149
    %170 = vmatprep.subr.bf16.mxu0 0
    %171 = vmatpush1.bf16.msra.mxu0 %v150
    %172 = vmatprep.subr.bf16.mxu0 0
    %173 = vmatpush1.bf16.msra.mxu0 %v151
    %174 = vmatprep.subr.bf16.mxu0 0
    %175 = vmatpush1.bf16.msra.mxu0 %v152
    %176 = vmatprep.subr.bf16.mxu0 0
    %177 = vmatpush1.bf16.msra.mxu0 %v153
    %178 = vmatprep.subr.bf16.mxu0 0
    %179 = vmatpush1.bf16.msra.mxu0 0
    %180 = vmatprep.subr.bf16.mxu0 0
    %181 = vmatpush1.bf16.msra.mxu0 0
    %182 = vmatprep.subr.bf16.mxu0 0
    %183 = vmatpush1.bf16.msra.mxu0 0
    %184 = vmatprep.subr.bf16.mxu0 0
    %185 = vmatpush1.bf16.msra.mxu0 0
    %186 = vmatprep.subr.bf16.mxu0 0
    %187 = vmatpush1.bf16.msra.mxu0 0
    %188 = vmatprep.subr.bf16.mxu0 0
    %189 = vmatpush1.bf16.msra.mxu0 0
    %190 = vmatprep.subr.bf16.mxu0 0
    %191 = vmatpush1.bf16.msra.mxu0 0
    %192 = vmatprep.subr.bf16.mxu0 0
    %193 = vmatpush1.bf16.msra.mxu0 0
    %194 = vmatprep.mubr.bf16.mxu0 0
    %195 = vmatmul.mubr.bf16.gmra.mrb[0].mxu0 %v90
    %v196 = vpop.f32.mrb[0].mxu0
    %v197 = vadd.f32 %v112, %v196
    %v198 = vpop.f32.mrb[0].mxu0
    %v199 = vpop.f32.mrb[0].mxu0
    %v200 = vadd.f32 %v112, %v199
    %v201 = vpop.f32.mrb[0].mxu0
    %202 = vdwg.mxu0
    %s203 = smul.u32 0, 128
    %s204 = sshra.s32 %s203, 7
    %s205 = sand.u32 %s203, 127
    %s206 = scalar_lea.vmem [#allocation3], %s204
    %v207 = vld [vmem:[%s206] sm:$0xff]
    %v208 = vld [vmem:[%s206 + $0x8] sm:$0xff]
    %v209 = vadd.f32 %v207, %v197
    %v210 = vadd.f32 %v208, %v200
    %211 = vst [vmem:[#allocation8] sm:$0xff] %v209
    %212 = vst [vmem:[#allocation8 + $0x8] sm:$0xff] %v210
    // Predicated region
    $region26: #{tpu_custom_call.1} parent=1 // pred_check
      _
    $region27: #{tpu_custom_call.1} parent=1 // pred_check_branch
      %214 = sbr.rel (0) target = $region29
    $region28: #{tpu_custom_call.1} parent=1 // pred_region
      %s216 = ssub.s32 256, 256
      %217 = vsyncadd [#allocation5], %s216
      %s218 = sshll.u32 [#allocation8], 4
      %s219 = int_to_ptr.vmem [resolvable:$true] %s218
      %224 = dma.vmem_to_hbm [thread:$0]  %s219, 256, %s3, [#allocation5], 128, 128, 8
    $region29: #{tpu_custom_call.1} parent=1 // pred_fallthru
      _
    // Predicated region
    $region30: #{tpu_custom_call.1} parent=1 // pred_check
      _
    $region31: #{tpu_custom_call.1} parent=1 // pred_check_branch
      %226 = sbr.rel (0) target = $region33
    $region32: #{tpu_custom_call.1} parent=1 // pred_region
      %227 = dma.done [#allocation5], 256
    $region33: #{tpu_custom_call.1} parent=1 // pred_fallthru
      _
    %228 = vsyncpa [#allocation4], 1
    %229 = vsyncpa [#allocation7], 1
    %230 = vsyncpa [#allocation5], 1

</llo_original>
